<compile_context>
chip_gen: v5e
topology: v5e:2x2
jax: 0.10.0
libtpu: 0.0.40
codegen_flags: <defaults>
</compile_context>

<pallas_src>
import numpy as np
import jax
import jax.numpy as jnp
from jax.experimental import pallas as pl
from jax.experimental.pallas import tpu as pltpu


def _time_embed_kernel(ts_ref, pe_ref, w1_ref, b1_ref, w2_ref, b2_ref, o_ref):
    """Fused PE-row gather -> Linear -> SiLU -> Linear, everything resident in VMEM.

    ts_ref : VMEM (tm, 1) int32         per-tile timesteps
    pe_ref : VMEM (max_len, D) f32      whole sinusoidal PE table (resident)
    w*_ref : VMEM (D, D) bf16 (in, out layout); b*_ref: VMEM (1, D) f32
    o_ref  : VMEM (tm, D) f32 output tile
    """
    tm = o_ref.shape[0]
    max_len = pe_ref.shape[0]

    # Clamp: torch indexing would raise on OOB; VMEM refs have no bounds check and
    # an unclamped one-hot would silently produce all-zero rows.
    ts = jnp.clip(ts_ref[...], 0, max_len - 1)                          # (tm, 1)

    # Vectorized PE-row gather as a one-hot matmul on the MXU: (tm, L) @ (L, D).
    onehot = (jax.lax.broadcasted_iota(jnp.int32, (tm, max_len), 1) == ts)
    x = jnp.dot(onehot.astype(jnp.float32), pe_ref[...],
                preferred_element_type=jnp.float32)                     # exact gather

    # Weights are DMA'd as bf16 but upcast in vregs: half the HBM traffic, f32 math.
    h = jnp.dot(x, w1_ref[...].astype(jnp.float32),
                preferred_element_type=jnp.float32) + b1_ref[...]
    h = h * jax.nn.sigmoid(h)                                           # SiLU (EUP)
    o = jnp.dot(h, w2_ref[...].astype(jnp.float32),
                preferred_element_type=jnp.float32) + b2_ref[...]
    o_ref[...] = o.astype(o_ref.dtype)


def prepare_params(w1, b1, w2, b2, weight_dtype=jnp.bfloat16):
    """One-time parameter prep (call at parameter-load time, NOT per forward):
    torch Linear stores (out, in) -> kernel wants (in, out); weights stored in bf16
    to halve the HBM->VMEM DMA while the in-kernel math stays f32."""
    D = w1.shape[0]
    return (jnp.asarray(w1, jnp.float32).T.astype(weight_dtype),
            jnp.asarray(b1, jnp.float32).reshape(1, D),
            jnp.asarray(w2, jnp.float32).T.astype(weight_dtype),
            jnp.asarray(b2, jnp.float32).reshape(1, D))


def _round_up(x, m):
    return ((x + m - 1) // m) * m


def _choose_tiling(B, max_tile):
    """Batch tiling: one tile for tiny B; otherwise >=2 tiles (v7x megacore) of up
    to `max_tile` rows, all multiples of 8 for the (8, 128) sublane constraint."""
    B8 = _round_up(B, 8)
    if B < 16:
        return B8, 1
    tm = min(_round_up(max_tile, 8), _round_up(pl.cdiv(B8, 2), 8))
    return tm, pl.cdiv(B8, tm)


def timestep_embedder_forward(timesteps, pe, w1_t, b1_r, w2_t, b2_r, *, max_tile=512):
    """timesteps: (B,) int; pe: (max_len, D) f32 (or (max_len, 1, D) torch buffer);
    params pre-prepared via prepare_params()."""
    if pe.ndim == 3:                                 # torch (L, 1, D) buffer -> (L, D)
        pe = pe.reshape(pe.shape[0], pe.shape[-1])
    max_len, D = pe.shape
    B = timesteps.shape[0]

    tm, n_tiles = _choose_tiling(B, max_tile)
    B_pad = tm * n_tiles

    ts = jnp.asarray(timesteps, jnp.int32).reshape(B, 1)
    if B_pad != B:
        ts = jnp.pad(ts, ((0, B_pad - B), (0, 0)))   # pad with t=0 (valid row)

    w_bytes = w1_t.dtype.itemsize * w1_t.size + w2_t.dtype.itemsize * w2_t.size
    cost = pl.CostEstimate(
        flops=2 * B_pad * max_len * D + 2 * 2 * B_pad * D * D,   # gather + 2 matmuls
        transcendentals=B_pad * D,                               # sigmoid
        bytes_accessed=(max_len * D * 4 + w_bytes + 2 * D * 4
                        + B_pad * 4 + B_pad * D * 4),
    )

    out = pl.pallas_call(
        _time_embed_kernel,
        out_shape=jax.ShapeDtypeStruct((B_pad, D), jnp.float32),
        grid_spec=pltpu.PrefetchScalarGridSpec(
            num_scalar_prefetch=0,
            grid=(n_tiles,),
            in_specs=[
                pl.BlockSpec((tm, 1), lambda i: (i, 0)),         # timesteps tile
                pl.BlockSpec((max_len, D), lambda i: (0, 0)),    # PE table (resident)
                pl.BlockSpec((D, D), lambda i: (0, 0)),          # W1^T (resident, bf16)
                pl.BlockSpec((1, D), lambda i: (0, 0)),          # b1
                pl.BlockSpec((D, D), lambda i: (0, 0)),          # W2^T (resident, bf16)
                pl.BlockSpec((1, D), lambda i: (0, 0)),          # b2
            ],
            out_specs=pl.BlockSpec((tm, D), lambda i: (i, 0)),
        ),
        compiler_params=pltpu.CompilerParams(
            dimension_semantics=("parallel",),       # batch tiles split across TCs (v7x)
            vmem_limit_bytes=8 * 1024 * 1024,        # ~1 MiB actual footprint; headroom
        ),
        cost_estimate=cost,
    )(ts, pe.astype(jnp.float32), w1_t, b1_r, w2_t, b2_r)

    if B_pad != B:
        out = out[:B]
    # (B, D) -> (1, B, D), same as permute(1, 0, 2) on the torch (B, 1, D) output.
    return out[None, :, :]


def make_sinusoidal_pe(max_len, d_model):
    """Standard MDM / transformer sinusoidal positional encoding, 2D (max_len, D)."""
    position = np.arange(max_len, dtype=np.float32)[:, None]                 # (L, 1)
    div_term = np.exp(np.arange(0, d_model, 2, dtype=np.float32)
                      * (-np.log(10000.0) / d_model))                        # (D/2,)
    pe = np.zeros((max_len, d_model), dtype=np.float32)
    pe[:, 0::2] = np.sin(position * div_term)
    pe[:, 1::2] = np.cos(position * div_term)
    return jnp.asarray(pe)                                                   # (L, D)


if __name__ == "__main__":
    latent_dim = 128       # D (both input and time_embed_dim)
    max_len = 64
    batch = 8

    key = jax.random.PRNGKey(0)
    k1, k2, k3, k4, k5 = jax.random.split(key, 5)

    # Deterministic PyTorch-Linear-style init: U(-1/sqrt(fan_in), 1/sqrt(fan_in)).
    bound = 1.0 / np.sqrt(latent_dim)
    w1 = jax.random.uniform(k1, (latent_dim, latent_dim), jnp.float32, -bound, bound)
    b1 = jax.random.uniform(k2, (latent_dim,), jnp.float32, -bound, bound)
    w2 = jax.random.uniform(k3, (latent_dim, latent_dim), jnp.float32, -bound, bound)
    b2 = jax.random.uniform(k4, (latent_dim,), jnp.float32, -bound, bound)

    pe = make_sinusoidal_pe(max_len, latent_dim)                             # (L, D)
    timesteps = jax.random.randint(k5, (batch,), 0, max_len, dtype=jnp.int32)

    # One-time weight prep (transpose + bf16), hoisted off the hot path.
    params = prepare_params(w1, b1, w2, b2)

    fwd = jax.jit(timestep_embedder_forward)
    out = jax.block_until_ready(fwd(timesteps, pe, *params))
    assert out.shape == (1, batch, latent_dim), out.shape

    # Pure-JAX f32 reference for correctness.
    x_ref = pe[timesteps]                                                    # (B, D)
    h_ref = x_ref @ w1.T + b1
    h_ref = h_ref * jax.nn.sigmoid(h_ref)
    y_ref = (h_ref @ w2.T + b2)[None, :, :]                                  # (1, B, D)
    # Tolerance relaxed for bf16 weight storage (accumulation/math stays f32).
    np.testing.assert_allclose(np.asarray(out), np.asarray(y_ref), rtol=2e-2, atol=2e-2)

    print("KERNEL_OK")
</pallas_src>

<mosaic_0001>
module attributes {stable_mosaic.version = 11 : i64} {
  func.func @_time_embed_kernel(%arg0: i32, %arg1: memref<8x1xi32, #tpu.memory_space<vmem>>, %arg2: memref<64x128xf32, #tpu.memory_space<vmem>>, %arg3: memref<128x128xbf16, #tpu.memory_space<vmem>>, %arg4: memref<1x128xf32, #tpu.memory_space<vmem>>, %arg5: memref<128x128xbf16, #tpu.memory_space<vmem>>, %arg6: memref<1x128xf32, #tpu.memory_space<vmem>>, %arg7: memref<8x128xf32, #tpu.memory_space<vmem>>) attributes {dimension_semantics = [#tpu.dimension_semantics<parallel>], iteration_bounds = array<i64: 1>, scalar_prefetch = 0 : i64, scratch_operands = 0 : i64, tpu.core_type = #tpu.core_type<tc>, window_params = [{transform_indices = @transform_0, window_bounds = array<i64: 8, 1>}, {pipeline_mode = #tpu.pipeline_mode<synchronous>, transform_indices = @transform_1, window_bounds = array<i64: 64, 128>}, {pipeline_mode = #tpu.pipeline_mode<synchronous>, transform_indices = @transform_2, window_bounds = array<i64: 128, 128>}, {pipeline_mode = #tpu.pipeline_mode<synchronous>, transform_indices = @transform_3, window_bounds = array<i64: 1, 128>}, {pipeline_mode = #tpu.pipeline_mode<synchronous>, transform_indices = @transform_4, window_bounds = array<i64: 128, 128>}, {pipeline_mode = #tpu.pipeline_mode<synchronous>, transform_indices = @transform_5, window_bounds = array<i64: 1, 128>}, {transform_indices = @transform_6, window_bounds = array<i64: 8, 128>}]} {
    %c0 = arith.constant 0 : index
    %c0_0 = arith.constant 0 : index
    %0 = vector.load %arg1[%c0, %c0_0] : memref<8x1xi32, #tpu.memory_space<vmem>>, vector<8x1xi32>
    %c0_i32 = arith.constant 0 : i32
    %c63_i32 = arith.constant 63 : i32
    %1 = vector.broadcast %c0_i32 : i32 to vector<8x1xi32>
    %2 = arith.maxsi %1, %0 : vector<8x1xi32>
    %3 = vector.broadcast %c63_i32 : i32 to vector<8x1xi32>
    %4 = arith.minsi %3, %2 : vector<8x1xi32>
    %5 = tpu.iota {dimensions = array<i32: 1>} : vector<8x64xi32>
    %6 = vector.broadcast %4 : vector<8x1xi32> to vector<8x64xi32>
    %7 = arith.cmpi eq, %5, %6 : vector<8x64xi32>
    %8 = arith.extui %7 : vector<8x64xi1> to vector<8x64xi32>
    %9 = arith.sitofp %8 : vector<8x64xi32> to vector<8x64xf32>
    %c0_1 = arith.constant 0 : index
    %c0_2 = arith.constant 0 : index
    %10 = vector.load %arg2[%c0_1, %c0_2] : memref<64x128xf32, #tpu.memory_space<vmem>>, vector<64x128xf32>
    %cst = arith.constant dense<0.000000e+00> : vector<8x128xf32>
    %11 = tpu.matmul %9, %10, %cst {dimension_numbers = #tpu.dot_dimension_numbers<[1], [0], [0], [1], [0, 0, 1, 1], [], []>} : vector<8x64xf32>, vector<64x128xf32>, vector<8x128xf32> -> vector<8x128xf32>
    %c0_3 = arith.constant 0 : index
    %c0_4 = arith.constant 0 : index
    %12 = vector.load %arg3[%c0_3, %c0_4] : memref<128x128xbf16, #tpu.memory_space<vmem>>, vector<128x128xbf16>
    %13 = arith.extf %12 : vector<128x128xbf16> to vector<128x128xf32>
    %cst_5 = arith.constant dense<0.000000e+00> : vector<8x128xf32>
    %14 = tpu.matmul %11, %13, %cst_5 {dimension_numbers = #tpu.dot_dimension_numbers<[1], [0], [0], [1], [0, 0, 1, 1], [], []>} : vector<8x128xf32>, vector<128x128xf32>, vector<8x128xf32> -> vector<8x128xf32>
    %c0_6 = arith.constant 0 : index
    %c0_7 = arith.constant 0 : index
    %15 = vector.load %arg4[%c0_6, %c0_7] : memref<1x128xf32, #tpu.memory_space<vmem>>, vector<1x128xf32>
    %16 = vector.broadcast %15 : vector<1x128xf32> to vector<8x128xf32>
    %17 = arith.addf %14, %16 : vector<8x128xf32>
    %18 = arith.negf %17 : vector<8x128xf32>
    %19 = math.exp %18 : vector<8x128xf32>
    %cst_8 = arith.constant 1.000000e+00 : f32
    %20 = vector.broadcast %cst_8 : f32 to vector<8x128xf32>
    %21 = arith.addf %20, %19 : vector<8x128xf32>
    %22 = arith.divf %20, %21 : vector<8x128xf32>
    %23 = arith.mulf %17, %22 : vector<8x128xf32>
    %c0_9 = arith.constant 0 : index
    %c0_10 = arith.constant 0 : index
    %24 = vector.load %arg5[%c0_9, %c0_10] : memref<128x128xbf16, #tpu.memory_space<vmem>>, vector<128x128xbf16>
    %25 = arith.extf %24 : vector<128x128xbf16> to vector<128x128xf32>
    %cst_11 = arith.constant dense<0.000000e+00> : vector<8x128xf32>
    %26 = tpu.matmul %23, %25, %cst_11 {dimension_numbers = #tpu.dot_dimension_numbers<[1], [0], [0], [1], [0, 0, 1, 1], [], []>} : vector<8x128xf32>, vector<128x128xf32>, vector<8x128xf32> -> vector<8x128xf32>
    %c0_12 = arith.constant 0 : index
    %c0_13 = arith.constant 0 : index
    %27 = vector.load %arg6[%c0_12, %c0_13] : memref<1x128xf32, #tpu.memory_space<vmem>>, vector<1x128xf32>
    %28 = vector.broadcast %27 : vector<1x128xf32> to vector<8x128xf32>
    %29 = arith.addf %26, %28 : vector<8x128xf32>
    %c0_14 = arith.constant 0 : index
    %c0_15 = arith.constant 0 : index
    %30 = vector.load %arg7[%c0_14, %c0_15] : memref<8x128xf32, #tpu.memory_space<vmem>>, vector<8x128xf32>
    tpu.vector_store %arg7[%c0_14, %c0_15], %29 {strides = array<i32>} : memref<8x128xf32, #tpu.memory_space<vmem>>, vector<8x128xf32>,
    return
  }
  func.func @transform_0(%arg0: i32) -> (i32, i32) {
    %c0_i32 = arith.constant 0 : i32
    %c0_i32_0 = arith.constant 0 : i32
    return %arg0, %c0_i32 : i32, i32
  }
  func.func @transform_1(%arg0: i32) -> (i32, i32) {
    %c0_i32 = arith.constant 0 : i32
    %c0_i32_0 = arith.constant 0 : i32
    %c0_i32_1 = arith.constant 0 : i32
    return %c0_i32, %c0_i32_0 : i32, i32
  }
  func.func @transform_2(%arg0: i32) -> (i32, i32) {
    %c0_i32 = arith.constant 0 : i32
    %c0_i32_0 = arith.constant 0 : i32
    %c0_i32_1 = arith.constant 0 : i32
    return %c0_i32, %c0_i32_0 : i32, i32
  }
  func.func @transform_3(%arg0: i32) -> (i32, i32) {
    %c0_i32 = arith.constant 0 : i32
    %c0_i32_0 = arith.constant 0 : i32
    %c0_i32_1 = arith.constant 0 : i32
    return %c0_i32, %c0_i32_0 : i32, i32
  }
  func.func @transform_4(%arg0: i32) -> (i32, i32) {
    %c0_i32 = arith.constant 0 : i32
    %c0_i32_0 = arith.constant 0 : i32
    %c0_i32_1 = arith.constant 0 : i32
    return %c0_i32, %c0_i32_0 : i32, i32
  }
  func.func @transform_5(%arg0: i32) -> (i32, i32) {
    %c0_i32 = arith.constant 0 : i32
    %c0_i32_0 = arith.constant 0 : i32
    %c0_i32_1 = arith.constant 0 : i32
    return %c0_i32, %c0_i32_0 : i32, i32
  }
  func.func @transform_6(%arg0: i32) -> (i32, i32) {
    %c0_i32 = arith.constant 0 : i32
    %c0_i32_0 = arith.constant 0 : i32
    return %arg0, %c0_i32 : i32, i32
  }
}

</mosaic_0001>

<llo_original>
// kernel: timestep_embedder_forward.1
$region0: #{timestep_embedder_forward.1}
  #allocation0 [shape = 'u32[]', space=smem, size = 0x4, offset = 0x4, fixed_abs, tag = 'smem constant byte address 0x4 - core index']
  #allocation1 [shape = 'u32[72,128]{1,0:T(1,128)}', space=vmem, size = 0x9000, scoped, tag = 'internal scratch']
  %s0 = inlined_call_operand.vmem [shape: s32[8,1], index: 0, kind: input, shape index: {}]
  %s1 = inlined_call_operand.hbm [shape: f32[64,128], index: 1, kind: input, shape index: {}]
  %s2 = inlined_call_operand.hbm [shape: bf16[128,128], index: 2, kind: input, shape index: {}]
  %s3 = inlined_call_operand.vmem [shape: f32[1,128], index: 3, kind: input, shape index: {}]
  %s4 = inlined_call_operand.hbm [shape: bf16[128,128], index: 4, kind: input, shape index: {}]
  %s5 = inlined_call_operand.vmem [shape: f32[1,128], index: 5, kind: input, shape index: {}]
  %s6 = inlined_call_operand.hbm [shape: f32[8,128], index: 6, kind: output, shape index: {}]
  %s7 = sld [smem:[#allocation0]]
  $region46: #{timestep_embedder_forward.1} parent=0
    _
  %s9 = ssub.s32 1, %s7
  %s10 = scalar_select 0, %s9, %s7
  $region1: #{timestep_embedder_forward.1} parent=0
    #allocation2 [shape = 'u8[32768]{0}', space=vmem, size = 0x8000, scoped, tag = 'input window, operand 1, single buffered']
    #allocation3 [shape = 's32[1]{0}', space=sflag, size = 0x4, scoped, tag = 'scoped memory for timestep_embedder_forward.1']
    #allocation4 [shape = 's32[1]{0}', space=sflag, size = 0x4, scoped, tag = 'scoped memory for timestep_embedder_forward.1']
    #allocation5 [shape = 'u8[32768]{0}', space=vmem, size = 0x8000, scoped, tag = 'input window, operand 2, single buffered']
    #allocation6 [shape = 's32[1]{0}', space=sflag, size = 0x4, scoped, tag = 'scoped memory for timestep_embedder_forward.1']
    #allocation7 [shape = 'u8[32768]{0}', space=vmem, size = 0x8000, scoped, tag = 'input window, operand 4, single buffered']
    #allocation8 [shape = 'u8[4096]{0}', space=vmem, size = 0x1000, scoped, tag = 'output window, operand 0, single buffered']
    %11 = vsyncpa [#allocation3], 0
    %12 = vsyncpa [#allocation6], 0
    %13 = vsyncpa [#allocation4], 0
    // Predicated region
    $region2: #{timestep_embedder_forward.1} parent=1 // pred_check
      _
    $region3: #{timestep_embedder_forward.1} parent=1 // pred_check_branch
      %15 = sbr.rel (0) target = $region5
    $region4: #{timestep_embedder_forward.1} parent=1 // pred_region
      _
    $region5: #{timestep_embedder_forward.1} parent=1 // pred_fallthru
      _
    // Predicated region
    $region6: #{timestep_embedder_forward.1} parent=1 // pred_check
      _
    $region7: #{timestep_embedder_forward.1} parent=1 // pred_check_branch
      %17 = sbr.rel (0) target = $region9
    $region8: #{timestep_embedder_forward.1} parent=1 // pred_region
      %19 = vsyncadd [#allocation3], 0
      %s20 = sshll.u32 %s1, 4
      %s21 = int_to_ptr.hbm [resolvable:$true] %s20
      %s22 = sshll.u32 [#allocation2], 4
      %s23 = int_to_ptr.vmem [resolvable:$true] %s22
      %28 = dma.hbm_to_vmem [thread:$0]  %s21, 1024, %s23, [#allocation3], 128, 128, 8
    $region9: #{timestep_embedder_forward.1} parent=1 // pred_fallthru
      _
    // Predicated region
    $region10: #{timestep_embedder_forward.1} parent=1 // pred_check
      _
    $region11: #{timestep_embedder_forward.1} parent=1 // pred_check_branch
      %30 = sbr.rel (0) target = $region13
    $region12: #{timestep_embedder_forward.1} parent=1 // pred_region
      %32 = vsyncadd [#allocation6], 0
      %s33 = sshll.u32 %s2, 4
      %s34 = int_to_ptr.hbm [resolvable:$true] %s33
      %s35 = sshll.u32 [#allocation5], 4
      %s36 = int_to_ptr.vmem [resolvable:$true] %s35
      %41 = dma.hbm_to_vmem [thread:$0]  %s34, 1024, %s36, [#allocation6], 64, 64, 4
    $region13: #{timestep_embedder_forward.1} parent=1 // pred_fallthru
      _
    // Predicated region
    $region14: #{timestep_embedder_forward.1} parent=1 // pred_check
      _
    $region15: #{timestep_embedder_forward.1} parent=1 // pred_check_branch
      %43 = sbr.rel (0) target = $region17
    $region16: #{timestep_embedder_forward.1} parent=1 // pred_region
      _
    $region17: #{timestep_embedder_forward.1} parent=1 // pred_fallthru
      _
    // Predicated region
    $region18: #{timestep_embedder_forward.1} parent=1 // pred_check
      _
    $region19: #{timestep_embedder_forward.1} parent=1 // pred_check_branch
      %45 = sbr.rel (0) target = $region21
    $region20: #{timestep_embedder_forward.1} parent=1 // pred_region
      %47 = vsyncadd [#allocation6], 0
      %s48 = sshll.u32 %s4, 4
      %s49 = int_to_ptr.hbm [resolvable:$true] %s48
      %s50 = sshll.u32 [#allocation7], 4
      %s51 = int_to_ptr.vmem [resolvable:$true] %s50
      %56 = dma.hbm_to_vmem [thread:$0]  %s49, 1024, %s51, [#allocation6], 64, 64, 4
    $region21: #{timestep_embedder_forward.1} parent=1 // pred_fallthru
      _
    // Predicated region
    $region22: #{timestep_embedder_forward.1} parent=1 // pred_check
      _
    $region23: #{timestep_embedder_forward.1} parent=1 // pred_check_branch
      %58 = sbr.rel (0) target = $region25
    $region24: #{timestep_embedder_forward.1} parent=1 // pred_region
      _
    $region25: #{timestep_embedder_forward.1} parent=1 // pred_fallthru
      _
    // Predicated region
    $region26: #{timestep_embedder_forward.1} parent=1 // pred_check
      _
    $region27: #{timestep_embedder_forward.1} parent=1 // pred_check_branch
      %60 = sbr.rel (0) target = $region29
    $region28: #{timestep_embedder_forward.1} parent=1 // pred_region
      %62 = dma.done [#allocation3], 1024
    $region29: #{timestep_embedder_forward.1} parent=1 // pred_fallthru
      _
    // Predicated region
    $region30: #{timestep_embedder_forward.1} parent=1 // pred_check
      _
    $region31: #{timestep_embedder_forward.1} parent=1 // pred_check_branch
      %64 = sbr.rel (0) target = $region33
    $region32: #{timestep_embedder_forward.1} parent=1 // pred_region
      %66 = dma.done [#allocation6], 1024
    $region33: #{timestep_embedder_forward.1} parent=1 // pred_fallthru
      _
    // Predicated region
    $region34: #{timestep_embedder_forward.1} parent=1 // pred_check
      _
    $region35: #{timestep_embedder_forward.1} parent=1 // pred_check_branch
      %68 = sbr.rel (0) target = $region37
    $region36: #{timestep_embedder_forward.1} parent=1 // pred_region
      %70 = dma.done [#allocation6], 1024
    $region37: #{timestep_embedder_forward.1} parent=1 // pred_fallthru
      _
    %v71 = vld [vmem:[%s0] sm:$0xff]
    %vm72 = vcmp.gt.s32.totalorder %v71, 0
    %v73 = vsel %vm72, %v71, 0
    %vm74 = vcmp.lt.s32.totalorder %v73, 63
    %v75 = vsel %vm74, %v73, 63
    %v76 = vlaneseq
    %v77 = vand.u32 %v76, 127
    %78 = vset.pattern.permute.xlu0 0
    %79 = vperm.xlu0 %78, %v75
    %v80 = vpop.permute.xlu0 %79
    %vm81 = vcmp.eq.s32.totalorder %v77, %v80
    %v82 = vsel %vm81, 1, 0
    %v83 = vcvt.s32.f32 %v82
    %v84 = vld [vmem:[#allocation2] sm:$0xff]
    %v85 = vld [vmem:[#allocation2 + $0x8] sm:$0xff]
    %v86 = vld [vmem:[#allocation2 + $0x10] sm:$0xff]
    %v87 = vld [vmem:[#allocation2 + $0x18] sm:$0xff]
    %v88 = vld [vmem:[#allocation2 + $0x20] sm:$0xff]
    %v89 = vld [vmem:[#allocation2 + $0x28] sm:$0xff]
    %v90 = vld [vmem:[#allocation2 + $0x30] sm:$0xff]
    %v91 = vld [vmem:[#allocation2 + $0x38] sm:$0xff]
    %vm92 = vcmask 523264
    %v94 = vsel %vm92, %v83, 0
    %96 = vmatpush.msra.mxu0 0.0
    %97 = vmatpush.msra.mxu0 0.0
    %98 = vmatpush.msra.mxu0 0.0
    %99 = vmatpush.msra.mxu0 0.0
    %100 = vmatpush.msra.mxu0 0.0
    %101 = vmatpush.msra.mxu0 0.0
    %102 = vmatpush.msra.mxu0 0.0
    %103 = vmatpush.msra.mxu0 0.0
    %104 = vmatpush.msra.mxu0 %v91
    %105 = vmatpush.msra.mxu0 %v90
    %106 = vmatpush.msra.mxu0 %v89
    %107 = vmatpush.msra.mxu0 %v88
    %108 = vmatpush.msra.mxu0 %v87
    %109 = vmatpush.msra.mxu0 %v86
    %110 = vmatpush.msra.mxu0 %v85
    %111 = vmatpush.msra.mxu0 %v84
    %112 = vmatmul.f32.gmra.mxu0 %v94
    %v113 = vpop.f32.mrf.mxu0
    %v114 = vadd.f32 0.0, %v113
    %115 = vdwg.mxu0
    %v116 = vld [vmem:[#allocation5] sm:$0xf]
    %v117 = vld [vmem:[#allocation5 + $0x4] sm:$0xf]
    %v118 = vld [vmem:[#allocation5 + $0x8] sm:$0xf]
    %v119 = vld [vmem:[#allocation5 + $0xc] sm:$0xf]
    %v120 = vld [vmem:[#allocation5 + $0x10] sm:$0xf]
    %v121 = vld [vmem:[#allocation5 + $0x14] sm:$0xf]
    %v122 = vld [vmem:[#allocation5 + $0x18] sm:$0xf]
    %v123 = vld [vmem:[#allocation5 + $0x1c] sm:$0xf]
    %v124 = vld [vmem:[#allocation5 + $0x20] sm:$0xf]
    %v125 = vld [vmem:[#allocation5 + $0x24] sm:$0xf]
    %v126 = vld [vmem:[#allocation5 + $0x28] sm:$0xf]
    %v127 = vld [vmem:[#allocation5 + $0x2c] sm:$0xf]
    %v128 = vld [vmem:[#allocation5 + $0x30] sm:$0xf]
    %v129 = vld [vmem:[#allocation5 + $0x34] sm:$0xf]
    %v130 = vld [vmem:[#allocation5 + $0x38] sm:$0xf]
    %v131 = vld [vmem:[#allocation5 + $0x3c] sm:$0xf]
    %v132 = vunpack.c.l.bf16 %v116
    %v133 = vunpack.c.l.bf16 %v117
    %v134 = vunpack.c.l.bf16 %v118
    %v135 = vunpack.c.l.bf16 %v119
    %v136 = vunpack.c.l.bf16 %v120
    %v137 = vunpack.c.l.bf16 %v121
    %v138 = vunpack.c.l.bf16 %v122
    %v139 = vunpack.c.l.bf16 %v123
    %v140 = vunpack.c.l.bf16 %v124
    %v141 = vunpack.c.l.bf16 %v125
    %v142 = vunpack.c.l.bf16 %v126
    %v143 = vunpack.c.l.bf16 %v127
    %v144 = vunpack.c.l.bf16 %v128
    %v145 = vunpack.c.l.bf16 %v129
    %v146 = vunpack.c.l.bf16 %v130
    %v147 = vunpack.c.l.bf16 %v131
    %v148 = vld [vmem:[%s3] sm:$0x1]
    %v150 = vperm.slane %v148, 0
    %152 = vmatpush.msra.mxu0 %v147
    %153 = vmatpush.msra.mxu0 %v146
    %154 = vmatpush.msra.mxu0 %v145
    %155 = vmatpush.msra.mxu0 %v144
    %156 = vmatpush.msra.mxu0 %v143
    %157 = vmatpush.msra.mxu0 %v142
    %158 = vmatpush.msra.mxu0 %v141
    %159 = vmatpush.msra.mxu0 %v140
    %160 = vmatpush.msra.mxu0 %v139
    %161 = vmatpush.msra.mxu0 %v138
    %162 = vmatpush.msra.mxu0 %v137
    %163 = vmatpush.msra.mxu0 %v136
    %164 = vmatpush.msra.mxu0 %v135
    %165 = vmatpush.msra.mxu0 %v134
    %166 = vmatpush.msra.mxu0 %v133
    %167 = vmatpush.msra.mxu0 %v132
    %168 = vmatmul.f32.gmra.mxu0 %v114
    %v169 = vpop.f32.mrf.mxu0
    %v170 = vadd.f32 %v150, %v169
    %171 = vdwg.mxu0
    %v172 = vxor.u32 %v170, 2147483648
    %v173 = vmul.f32 %v172, 1.442695
    %v174 = vpow.pop %v173
    %v175 = vadd.f32 %v174, 1.0
    %v176 = vrcp.pop %v175
    %v177 = vmul.f32 %v175, %v176
    %v178 = vsub.f32 1.0, %v177
    %v179 = vmul.f32 %v176, %v178
    %v180 = vadd.f32 %v176, %v179
    %vm181 = vweird.f32 %v175
    %vm182 = vweird.f32 %v176
    %vm183 = vmor %vm181, %vm182
    %v184 = vsel %vm183, %v176, %v180
    %v185 = vand.u32 2147483647, %v175
    %vm186 = vcmp.eq.f32.partialorder %v185, 8.507059e+37
    %v187 = vand.u32 %v175, 2147483648
    %v188 = vor.u32 1.1754944e-38, %v187
    %v189 = vsel %vm186, %v188, %v184
    %v190 = vmul.f32 1.0, %v189
    %v191 = vmul.f32 %v170, %v190
    %v192 = vld [vmem:[#allocation7] sm:$0xf]
    %v193 = vld [vmem:[#allocation7 + $0x4] sm:$0xf]
    %v194 = vld [vmem:[#allocation7 + $0x8] sm:$0xf]
    %v195 = vld [vmem:[#allocation7 + $0xc] sm:$0xf]
    %v196 = vld [vmem:[#allocation7 + $0x10] sm:$0xf]
    %v197 = vld [vmem:[#allocation7 + $0x14] sm:$0xf]
    %v198 = vld [vmem:[#allocation7 + $0x18] sm:$0xf]
    %v199 = vld [vmem:[#allocation7 + $0x1c] sm:$0xf]
    %v200 = vld [vmem:[#allocation7 + $0x20] sm:$0xf]
    %v201 = vld [vmem:[#allocation7 + $0x24] sm:$0xf]
    %v202 = vld [vmem:[#allocation7 + $0x28] sm:$0xf]
    %v203 = vld [vmem:[#allocation7 + $0x2c] sm:$0xf]
    %v204 = vld [vmem:[#allocation7 + $0x30] sm:$0xf]
    %v205 = vld [vmem:[#allocation7 + $0x34] sm:$0xf]
    %v206 = vld [vmem:[#allocation7 + $0x38] sm:$0xf]
    %v207 = vld [vmem:[#allocation7 + $0x3c] sm:$0xf]
    %v208 = vunpack.c.l.bf16 %v192
    %v209 = vunpack.c.l.bf16 %v193
    %v210 = vunpack.c.l.bf16 %v194
    %v211 = vunpack.c.l.bf16 %v195
    %v212 = vunpack.c.l.bf16 %v196
    %v213 = vunpack.c.l.bf16 %v197
    %v214 = vunpack.c.l.bf16 %v198
    %v215 = vunpack.c.l.bf16 %v199
    %v216 = vunpack.c.l.bf16 %v200
    %v217 = vunpack.c.l.bf16 %v201
    %v218 = vunpack.c.l.bf16 %v202
    %v219 = vunpack.c.l.bf16 %v203
    %v220 = vunpack.c.l.bf16 %v204
    %v221 = vunpack.c.l.bf16 %v205
    %v222 = vunpack.c.l.bf16 %v206
    %v223 = vunpack.c.l.bf16 %v207
    %v224 = vld [vmem:[%s5] sm:$0x1]
    %v226 = vperm.slane %v224, 0
    %228 = vmatpush.msra.mxu0 %v223
    %229 = vmatpush.msra.mxu0 %v222
    %230 = vmatpush.msra.mxu0 %v221
    %231 = vmatpush.msra.mxu0 %v220
    %232 = vmatpush.msra.mxu0 %v219
    %233 = vmatpush.msra.mxu0 %v218
    %234 = vmatpush.msra.mxu0 %v217
    %235 = vmatpush.msra.mxu0 %v216
    %236 = vmatpush.msra.mxu0 %v215
    %237 = vmatpush.msra.mxu0 %v214
    %238 = vmatpush.msra.mxu0 %v213
    %239 = vmatpush.msra.mxu0 %v212
    %240 = vmatpush.msra.mxu0 %v211
    %241 = vmatpush.msra.mxu0 %v210
    %242 = vmatpush.msra.mxu0 %v209
    %243 = vmatpush.msra.mxu0 %v208
    %244 = vmatmul.f32.gmra.mxu0 %v191
    %v245 = vpop.f32.mrf.mxu0
    %v246 = vadd.f32 %v226, %v245
    %247 = vdwg.mxu0
    %248 = vst [vmem:[#allocation8] sm:$0xff] %v246
    // Predicated region
    $region38: #{timestep_embedder_forward.1} parent=1 // pred_check
      _
    $region39: #{timestep_embedder_forward.1} parent=1 // pred_check_branch
      %250 = sbr.rel (0) target = $region41
    $region40: #{timestep_embedder_forward.1} parent=1 // pred_region
      %252 = vsyncadd [#allocation4], 0
      %s254 = sshll.u32 [#allocation8], 4
      %s255 = int_to_ptr.vmem [resolvable:$true] %s254
      %s256 = sshll.u32 %s6, 4
      %s257 = int_to_ptr.hbm [resolvable:$true] %s256
      %259 = dma.vmem_to_hbm [thread:$0]  %s255, 128, %s257, [#allocation4]
    $region41: #{timestep_embedder_forward.1} parent=1 // pred_fallthru
      _
    // Predicated region
    $region42: #{timestep_embedder_forward.1} parent=1 // pred_check
      _
    $region43: #{timestep_embedder_forward.1} parent=1 // pred_check_branch
      %261 = sbr.rel (0) target = $region45
    $region44: #{timestep_embedder_forward.1} parent=1 // pred_region
      %263 = dma.done [#allocation4], 128
    $region45: #{timestep_embedder_forward.1} parent=1 // pred_fallthru
      _
    %264 = vsyncpa [#allocation3], 1
    %265 = vsyncpa [#allocation6], 1
    %266 = vsyncpa [#allocation4], 1

</llo_original>
